<compile_context>
chip_gen: v6e
topology: v6e:2x2x1
jax: 0.10.0
libtpu: 0.0.40
codegen_flags: <defaults>
</compile_context>

<pallas_src>
import functools

import jax
import jax.numpy as jnp
from jax.experimental import pallas as pl
from jax.experimental.pallas import tpu as pltpu

LATENT_DIM = 100
NUM_CLASSES = 10
IN_DIM = LATENT_DIM + NUM_CLASSES       # 110
H1 = 128
H2 = 256
OUT_DIM = 28 * 28                       # 784


def _round_up(x, m):
    return (x + m - 1) // m * m


def _device_kind():
    try:
        return jax.devices()[0].device_kind.lower()
    except Exception:
        return ""


def _num_tensorcores():
    # v7x has 2 TensorCores per chip; v5e/v6e have 1.
    return 2 if "v7" in _device_kind() else 1


def _bf16_epilogue_ok():
    # bf16 VPU/EUP only on v6e / v7x; keep f32 epilogue elsewhere (always correct).
    kind = _device_kind()
    return ("v6" in kind) or ("v7" in kind)


def _batch_tiling(batch, num_cores):
    """Pick (batch_tile, padded_batch) for the grid."""
    b8 = _round_up(batch, 8)
    if num_cores >= 2 and batch >= 16:
        # Dual-TC (v7x): an even number of >=2 balanced grid steps.
        tb = min(512, _round_up(pl.cdiv(b8, 2), 8))
        b_pad = _round_up(b8, 2 * tb)
    else:
        # Single-TC (v5e/v6e): one big tile minimizes per-grid-step overhead.
        tb = min(b8, 1024)
        b_pad = _round_up(b8, tb)
    return tb, b_pad


def _generator_kernel(z_ref, lbl_ref, cls_bias_ref, w1_ref, w2_ref, b2_ref,
                      w3_ref, b3_ref, o_ref, *, bf16_epilogue):
    """Fused MLP: relu(z@W1 + class_bias[label]) -> relu(@W2+b2) -> tanh(@W3+b3)."""
    tb = z_ref.shape[0]

    # In-kernel folded-embedding lookup: one-hot(label) @ class_bias  (TB, 128)
    lbl = lbl_ref[...]                                                # (TB, 1)
    classes = jax.lax.broadcasted_iota(jnp.int32, (tb, NUM_CLASSES), 1)
    onehot = (lbl == classes).astype(jnp.bfloat16)                    # (TB, 10)
    bias1 = jnp.dot(onehot, cls_bias_ref[...],
                    preferred_element_type=jnp.float32)               # (TB, 128)

    z = z_ref[...].astype(jnp.bfloat16)                               # (TB, 100)
    h1 = jnp.dot(z, w1_ref[...], preferred_element_type=jnp.float32)
    h1 = jnp.maximum(h1 + bias1, 0.0)                                 # (TB, 128)

    h2 = jnp.dot(h1.astype(jnp.bfloat16), w2_ref[...],
                 preferred_element_type=jnp.float32)
    h2 = jnp.maximum(h2 + b2_ref[...], 0.0)                           # (TB, 256)

    h3 = jnp.dot(h2.astype(jnp.bfloat16), w3_ref[...],
                 preferred_element_type=jnp.float32)                  # (TB, 784)
    if bf16_epilogue:
        # v6e/v7x: bf16 VPU add + bf16 EUP tanh feed the bf16 store directly.
        o_ref[...] = jnp.tanh(h3.astype(jnp.bfloat16)
                              + b3_ref[...].astype(jnp.bfloat16))
    else:
        # v5e (no bf16 VPU/EUP): f32 epilogue, cast on the store.
        o_ref[...] = jnp.tanh(h3 + b3_ref[...]).astype(jnp.bfloat16)


@jax.jit
def generator_forward(z, labels, kernel_params):
    """z: (B, 100) f32, labels: (B,) int -> (B, 1, 28, 28) bf16."""
    w1_z, class_bias, w2, b2, w3, b3 = kernel_params
    B = z.shape[0]
    tb, b_pad = _batch_tiling(B, _num_tensorcores())

    lbl = labels.astype(jnp.int32).reshape(B, 1)
    if b_pad != B:
        z = jnp.pad(z, ((0, b_pad - B), (0, 0)))
        lbl = jnp.pad(lbl, ((0, b_pad - B), (0, 0)))

    kernel = functools.partial(_generator_kernel,
                               bf16_epilogue=_bf16_epilogue_ok())

    out = pl.pallas_call(
        kernel,
        out_shape=jax.ShapeDtypeStruct((b_pad, OUT_DIM), jnp.bfloat16),
        grid_spec=pltpu.PrefetchScalarGridSpec(
            num_scalar_prefetch=0,
            grid=(b_pad // tb,),
            in_specs=[
                pl.BlockSpec((tb, LATENT_DIM), lambda i: (i, 0)),       # z tile
                pl.BlockSpec((tb, 1), lambda i: (i, 0)),                # labels
                pl.BlockSpec((NUM_CLASSES, H1), lambda i: (0, 0)),      # class_bias
                pl.BlockSpec((LATENT_DIM, H1), lambda i: (0, 0)),       # w1_z
                pl.BlockSpec((H1, H2), lambda i: (0, 0)),               # w2
                pl.BlockSpec((1, H2), lambda i: (0, 0)),                # b2
                pl.BlockSpec((H2, OUT_DIM), lambda i: (0, 0)),          # w3
                pl.BlockSpec((1, OUT_DIM), lambda i: (0, 0)),           # b3
            ],
            out_specs=pl.BlockSpec((tb, OUT_DIM), lambda i: (i, 0)),
        ),
        compiler_params=pltpu.CompilerParams(
            dimension_semantics=("parallel",),
            vmem_limit_bytes=32 * 1024 * 1024),
    )(z, lbl, class_bias, w1_z, w2, b2, w3, b3)

    # Only the padded-batch rows are dropped; the reshape is pure metadata.
    return out[:B].reshape(B, 1, 28, 28)


def init_params(key):
    """f32 parameters matching the PyTorch module's parameter shapes."""
    k_emb, k1, kb1, k2, kb2, k3, kb3 = jax.random.split(key, 7)

    # nn.Embedding(10, 10): N(0, 1)
    emb_table = jax.random.normal(k_emb, (NUM_CLASSES, NUM_CLASSES),
                                  jnp.float32)

    def linear_init(kw, kb, fan_in, fan_out):
        bound = 1.0 / jnp.sqrt(fan_in)
        w = jax.random.uniform(kw, (fan_in, fan_out), jnp.float32,
                               -bound, bound)
        b = jax.random.uniform(kb, (1, fan_out), jnp.float32, -bound, bound)
        return w, b

    w1, b1 = linear_init(k1, kb1, IN_DIM, H1)     # Linear(110, 128)
    w2, b2 = linear_init(k2, kb2, H1, H2)         # Linear(128, 256)
    w3, b3 = linear_init(k3, kb3, H2, OUT_DIM)    # Linear(256, 784)
    return (emb_table, w1, b1, w2, b2, w3, b3)


def prepare_kernel_params(params):
    """Fold embedding into a (10, 128) layer-1 bias table, cast weights to bf16."""
    emb_table, w1, b1, w2, b2, w3, b3 = params
    w1_z = w1[:LATENT_DIM].astype(jnp.bfloat16)                  # (100, 128)
    # class_bias[c] = emb[c] @ W1[100:110, :] + b1  (exact in f32)  # (10, 128)
    class_bias = (emb_table @ w1[LATENT_DIM:] + b1).astype(jnp.bfloat16)
    return (w1_z, class_bias, w2.astype(jnp.bfloat16), b2,
            w3.astype(jnp.bfloat16), b3)


def reference_forward(z, labels, params):
    """Pure-JAX f32 reference matching the PyTorch forward."""
    emb_table, w1, b1, w2, b2, w3, b3 = params
    x = jnp.concatenate([z, jnp.take(emb_table, labels, axis=0)], axis=-1)
    h1 = jnp.maximum(x @ w1 + b1, 0.0)
    h2 = jnp.maximum(h1 @ w2 + b2, 0.0)
    return jnp.tanh(h2 @ w3 + b3).reshape(-1, 1, 28, 28)


if __name__ == "__main__":
    key = jax.random.PRNGKey(0)
    k_params, k_z, k_lbl = jax.random.split(key, 3)

    params = init_params(k_params)
    kernel_params = prepare_kernel_params(params)

    B = 8
    z = jax.random.normal(k_z, (B, LATENT_DIM), jnp.float32)
    labels = jax.random.randint(k_lbl, (B,), 0, NUM_CLASSES, jnp.int32)

    out = generator_forward(z, labels, kernel_params)
    out = jax.block_until_ready(out)

    ref = reference_forward(z, labels, params)
    assert out.shape == (B, 1, 28, 28), out.shape
    # bf16 MXU operands, bf16 class-bias table, and bf16 output vs. the f32
    # reference: tanh output lies in [-1, 1], so a 2.5e-2 absolute tolerance
    # comfortably covers the accumulated bf16 rounding error.
    assert jnp.allclose(out.astype(jnp.float32), ref, atol=2.5e-2, rtol=0.0), \
        "mismatch vs reference"

    print("KERNEL_OK")
</pallas_src>

<mosaic_0001>
module attributes {stable_mosaic.version = 11 : i64} {
  func.func @_generator_kernel(%arg0: i32, %arg1: memref<8x100xf32, #tpu.memory_space<vmem>>, %arg2: memref<8x1xi32, #tpu.memory_space<vmem>>, %arg3: memref<10x128xbf16, #tpu.memory_space<vmem>>, %arg4: memref<100x128xbf16, #tpu.memory_space<vmem>>, %arg5: memref<128x256xbf16, #tpu.memory_space<vmem>>, %arg6: memref<1x256xf32, #tpu.memory_space<vmem>>, %arg7: memref<256x784xbf16, #tpu.memory_space<vmem>>, %arg8: memref<1x784xf32, #tpu.memory_space<vmem>>, %arg9: memref<8x784xbf16, #tpu.memory_space<vmem>>) attributes {dimension_semantics = [#tpu.dimension_semantics<parallel>], iteration_bounds = array<i64: 1>, scalar_prefetch = 0 : i64, scratch_operands = 0 : i64, tpu.core_type = #tpu.core_type<tc>, window_params = [{transform_indices = @transform_0, window_bounds = array<i64: 8, 100>}, {transform_indices = @transform_1, window_bounds = array<i64: 8, 1>}, {pipeline_mode = #tpu.pipeline_mode<synchronous>, transform_indices = @transform_2, window_bounds = array<i64: 10, 128>}, {pipeline_mode = #tpu.pipeline_mode<synchronous>, transform_indices = @transform_3, window_bounds = array<i64: 100, 128>}, {pipeline_mode = #tpu.pipeline_mode<synchronous>, transform_indices = @transform_4, window_bounds = array<i64: 128, 256>}, {pipeline_mode = #tpu.pipeline_mode<synchronous>, transform_indices = @transform_5, window_bounds = array<i64: 1, 256>}, {pipeline_mode = #tpu.pipeline_mode<synchronous>, transform_indices = @transform_6, window_bounds = array<i64: 256, 784>}, {pipeline_mode = #tpu.pipeline_mode<synchronous>, transform_indices = @transform_7, window_bounds = array<i64: 1, 784>}, {transform_indices = @transform_8, window_bounds = array<i64: 8, 784>}]} {
    %c0 = arith.constant 0 : index
    %c0_0 = arith.constant 0 : index
    %0 = vector.load %arg2[%c0, %c0_0] : memref<8x1xi32, #tpu.memory_space<vmem>>, vector<8x1xi32>
    %1 = tpu.iota {dimensions = array<i32: 1>} : vector<8x10xi32>
    %2 = vector.broadcast %0 : vector<8x1xi32> to vector<8x10xi32>
    %3 = arith.cmpi eq, %2, %1 : vector<8x10xi32>
    %4 = arith.extui %3 : vector<8x10xi1> to vector<8x10xi32>
    %5 = arith.sitofp %4 : vector<8x10xi32> to vector<8x10xf32>
    %6 = arith.truncf %5 : vector<8x10xf32> to vector<8x10xbf16>
    %c0_1 = arith.constant 0 : index
    %c0_2 = arith.constant 0 : index
    %7 = vector.load %arg3[%c0_1, %c0_2] : memref<10x128xbf16, #tpu.memory_space<vmem>>, vector<10x128xbf16>
    %cst = arith.constant dense<0.000000e+00> : vector<8x128xf32>
    %8 = tpu.matmul %6, %7, %cst {dimension_numbers = #tpu.dot_dimension_numbers<[1], [0], [0], [1], [0, 0, 1, 1], [], []>} : vector<8x10xbf16>, vector<10x128xbf16>, vector<8x128xf32> -> vector<8x128xf32>
    %c0_3 = arith.constant 0 : index
    %c0_4 = arith.constant 0 : index
    %9 = vector.load %arg1[%c0_3, %c0_4] : memref<8x100xf32, #tpu.memory_space<vmem>>, vector<8x100xf32>
    %10 = arith.truncf %9 : vector<8x100xf32> to vector<8x100xbf16>
    %c0_5 = arith.constant 0 : index
    %c0_6 = arith.constant 0 : index
    %11 = vector.load %arg4[%c0_5, %c0_6] : memref<100x128xbf16, #tpu.memory_space<vmem>>, vector<100x128xbf16>
    %cst_7 = arith.constant dense<0.000000e+00> : vector<8x128xf32>
    %12 = tpu.matmul %10, %11, %cst_7 {dimension_numbers = #tpu.dot_dimension_numbers<[1], [0], [0], [1], [0, 0, 1, 1], [], []>} : vector<8x100xbf16>, vector<100x128xbf16>, vector<8x128xf32> -> vector<8x128xf32>
    %13 = arith.addf %12, %8 : vector<8x128xf32>
    %cst_8 = arith.constant 0.000000e+00 : f32
    %14 = vector.broadcast %cst_8 : f32 to vector<8x128xf32>
    %15 = arith.maximumf %13, %14 : vector<8x128xf32>
    %16 = arith.truncf %15 : vector<8x128xf32> to vector<8x128xbf16>
    %c0_9 = arith.constant 0 : index
    %c0_10 = arith.constant 0 : index
    %17 = vector.load %arg5[%c0_9, %c0_10] : memref<128x256xbf16, #tpu.memory_space<vmem>>, vector<128x256xbf16>
    %cst_11 = arith.constant dense<0.000000e+00> : vector<8x256xf32>
    %18 = tpu.matmul %16, %17, %cst_11 {dimension_numbers = #tpu.dot_dimension_numbers<[1], [0], [0], [1], [0, 0, 1, 1], [], []>} : vector<8x128xbf16>, vector<128x256xbf16>, vector<8x256xf32> -> vector<8x256xf32>
    %c0_12 = arith.constant 0 : index
    %c0_13 = arith.constant 0 : index
    %19 = vector.load %arg6[%c0_12, %c0_13] : memref<1x256xf32, #tpu.memory_space<vmem>>, vector<1x256xf32>
    %20 = vector.broadcast %19 : vector<1x256xf32> to vector<8x256xf32>
    %21 = arith.addf %18, %20 : vector<8x256xf32>
    %cst_14 = arith.constant 0.000000e+00 : f32
    %22 = vector.broadcast %cst_14 : f32 to vector<8x256xf32>
    %23 = arith.maximumf %21, %22 : vector<8x256xf32>
    %24 = arith.truncf %23 : vector<8x256xf32> to vector<8x256xbf16>
    %c0_15 = arith.constant 0 : index
    %c0_16 = arith.constant 0 : index
    %25 = vector.load %arg7[%c0_15, %c0_16] : memref<256x784xbf16, #tpu.memory_space<vmem>>, vector<256x784xbf16>
    %cst_17 = arith.constant dense<0.000000e+00> : vector<8x784xf32>
    %26 = tpu.matmul %24, %25, %cst_17 {dimension_numbers = #tpu.dot_dimension_numbers<[1], [0], [0], [1], [0, 0, 1, 1], [], []>} : vector<8x256xbf16>, vector<256x784xbf16>, vector<8x784xf32> -> vector<8x784xf32>
    %c0_18 = arith.constant 0 : index
    %c0_19 = arith.constant 0 : index
    %27 = vector.load %arg8[%c0_18, %c0_19] : memref<1x784xf32, #tpu.memory_space<vmem>>, vector<1x784xf32>
    %28 = vector.broadcast %27 : vector<1x784xf32> to vector<8x784xf32>
    %29 = arith.addf %26, %28 : vector<8x784xf32>
    %30 = math.tanh %29 : vector<8x784xf32>
    %31 = arith.truncf %30 : vector<8x784xf32> to vector<8x784xbf16>
    %c0_20 = arith.constant 0 : index
    %c0_21 = arith.constant 0 : index
    %32 = vector.load %arg9[%c0_20, %c0_21] : memref<8x784xbf16, #tpu.memory_space<vmem>>, vector<8x784xbf16>
    tpu.vector_store %arg9[%c0_20, %c0_21], %31 {strides = array<i32>} : memref<8x784xbf16, #tpu.memory_space<vmem>>, vector<8x784xbf16>,
    return
  }
  func.func @transform_0(%arg0: i32) -> (i32, i32) {
    %c0_i32 = arith.constant 0 : i32
    %c0_i32_0 = arith.constant 0 : i32
    return %arg0, %c0_i32 : i32, i32
  }
  func.func @transform_1(%arg0: i32) -> (i32, i32) {
    %c0_i32 = arith.constant 0 : i32
    %c0_i32_0 = arith.constant 0 : i32
    return %arg0, %c0_i32 : i32, i32
  }
  func.func @transform_2(%arg0: i32) -> (i32, i32) {
    %c0_i32 = arith.constant 0 : i32
    %c0_i32_0 = arith.constant 0 : i32
    %c0_i32_1 = arith.constant 0 : i32
    return %c0_i32, %c0_i32_0 : i32, i32
  }
  func.func @transform_3(%arg0: i32) -> (i32, i32) {
    %c0_i32 = arith.constant 0 : i32
    %c0_i32_0 = arith.constant 0 : i32
    %c0_i32_1 = arith.constant 0 : i32
    return %c0_i32, %c0_i32_0 : i32, i32
  }
  func.func @transform_4(%arg0: i32) -> (i32, i32) {
    %c0_i32 = arith.constant 0 : i32
    %c0_i32_0 = arith.constant 0 : i32
    %c0_i32_1 = arith.constant 0 : i32
    return %c0_i32, %c0_i32_0 : i32, i32
  }
  func.func @transform_5(%arg0: i32) -> (i32, i32) {
    %c0_i32 = arith.constant 0 : i32
    %c0_i32_0 = arith.constant 0 : i32
    %c0_i32_1 = arith.constant 0 : i32
    return %c0_i32, %c0_i32_0 : i32, i32
  }
  func.func @transform_6(%arg0: i32) -> (i32, i32) {
    %c0_i32 = arith.constant 0 : i32
    %c0_i32_0 = arith.constant 0 : i32
    %c0_i32_1 = arith.constant 0 : i32
    return %c0_i32, %c0_i32_0 : i32, i32
  }
  func.func @transform_7(%arg0: i32) -> (i32, i32) {
    %c0_i32 = arith.constant 0 : i32
    %c0_i32_0 = arith.constant 0 : i32
    %c0_i32_1 = arith.constant 0 : i32
    return %c0_i32, %c0_i32_0 : i32, i32
  }
  func.func @transform_8(%arg0: i32) -> (i32, i32) {
    %c0_i32 = arith.constant 0 : i32
    %c0_i32_0 = arith.constant 0 : i32
    return %arg0, %c0_i32 : i32, i32
  }
}

</mosaic_0001>

<llo_original>
// kernel: generator_forward.1
$region0: #{generator_forward.1}
  #allocation0 [shape = 'u32[]', space=smem, size = 0x4, offset = 0x4, fixed_abs, tag = 'smem constant byte address 0x4 - core index']
  #allocation1 [shape = 'u32[144,128]{1,0:T(1,128)}', space=vmem, size = 0x12000, scoped, tag = 'internal scratch']
  %s0 = inlined_call_operand.vmem [shape: f32[8,100], index: 0, kind: input, shape index: {}]
  %s1 = inlined_call_operand.vmem [shape: s32[8,1], index: 1, kind: input, shape index: {}]
  %s2 = inlined_call_operand.vmem [shape: bf16[10,128], index: 2, kind: input, shape index: {}]
  %s3 = inlined_call_operand.vmem [shape: bf16[100,128], index: 3, kind: input, shape index: {}]
  %s4 = inlined_call_operand.vmem [shape: bf16[128,256], index: 4, kind: input, shape index: {}]
  %s5 = inlined_call_operand.vmem [shape: f32[1,256], index: 5, kind: input, shape index: {}]
  %s6 = inlined_call_operand.vmem [shape: bf16[256,784], index: 6, kind: input, shape index: {}]
  %s7 = inlined_call_operand.vmem [shape: f32[1,784], index: 7, kind: input, shape index: {}]
  %s8 = inlined_call_operand.vmem [shape: bf16[8,784], index: 8, kind: output, shape index: {}]
  %s9 = sld [smem:[#allocation0]]
  $region42: #{generator_forward.1} parent=0
    _
  %s11 = ssub.s32 1, %s9
  %s12 = scalar_select 0, %s11, %s9
  // Predicated region
  $region2: #{generator_forward.1} parent=0 // pred_check
    _
  $region3: #{generator_forward.1} parent=0 // pred_check_branch
    %14 = sbr.rel (0) target = $region5
  $region4: #{generator_forward.1} parent=0 // pred_region
    _
  $region5: #{generator_forward.1} parent=0 // pred_fallthru
    _
  // Predicated region
  $region6: #{generator_forward.1} parent=0 // pred_check
    _
  $region7: #{generator_forward.1} parent=0 // pred_check_branch
    %16 = sbr.rel (0) target = $region9
  $region8: #{generator_forward.1} parent=0 // pred_region
    _
  $region9: #{generator_forward.1} parent=0 // pred_fallthru
    _
  // Predicated region
  $region10: #{generator_forward.1} parent=0 // pred_check
    _
  $region11: #{generator_forward.1} parent=0 // pred_check_branch
    %18 = sbr.rel (0) target = $region13
  $region12: #{generator_forward.1} parent=0 // pred_region
    _
  $region13: #{generator_forward.1} parent=0 // pred_fallthru
    _
  // Predicated region
  $region14: #{generator_forward.1} parent=0 // pred_check
    _
  $region15: #{generator_forward.1} parent=0 // pred_check_branch
    %20 = sbr.rel (0) target = $region17
  $region16: #{generator_forward.1} parent=0 // pred_region
    _
  $region17: #{generator_forward.1} parent=0 // pred_fallthru
    _
  // Predicated region
  $region18: #{generator_forward.1} parent=0 // pred_check
    _
  $region19: #{generator_forward.1} parent=0 // pred_check_branch
    %22 = sbr.rel (0) target = $region21
  $region20: #{generator_forward.1} parent=0 // pred_region
    _
  $region21: #{generator_forward.1} parent=0 // pred_fallthru
    _
  // Predicated region
  $region22: #{generator_forward.1} parent=0 // pred_check
    _
  $region23: #{generator_forward.1} parent=0 // pred_check_branch
    %24 = sbr.rel (0) target = $region25
  $region24: #{generator_forward.1} parent=0 // pred_region
    _
  $region25: #{generator_forward.1} parent=0 // pred_fallthru
    _
  // Predicated region
  $region26: #{generator_forward.1} parent=0 // pred_check
    _
  $region27: #{generator_forward.1} parent=0 // pred_check_branch
    %26 = sbr.rel (0) target = $region29
  $region28: #{generator_forward.1} parent=0 // pred_region
    _
  $region29: #{generator_forward.1} parent=0 // pred_fallthru
    _
  // Predicated region
  $region30: #{generator_forward.1} parent=0 // pred_check
    _
  $region31: #{generator_forward.1} parent=0 // pred_check_branch
    %28 = sbr.rel (0) target = $region33
  $region32: #{generator_forward.1} parent=0 // pred_region
    _
  $region33: #{generator_forward.1} parent=0 // pred_fallthru
    _
  %v30 = vld [vmem:[%s1] sm:$0xff]
  %v31 = vlaneseq
  %v32 = vand.u32 %v31, 127
  %33 = vset.pattern.permute.xlu0 0
  %34 = vperm.xlu0 %33, %v30
  %v35 = vpop.permute.xlu0 %34
  %vm36 = vcmp.eq.s32.totalorder %v35, %v32
  %v37 = vsel %vm36, 1, 0
  %v38 = vcvt.s32.f32 %v37
  %v39 = vpack.c.bf16 %v38, %v38
  %v40 = vld [vmem:[%s2] sm:$0xf]
  %v41 = vld [vmem:[%s2 + $0x4] sm:$0x1]
  %v44 = vunpack.c.l.b16 %v40
  %v45 = vunpack.c.l.b16 %v41
  %v46 = vpack.c.b16 %v45, %v44
  %vm47 = vcmask 80896
  %v49 = vsel %vm47, %v39, 0
  %vm51 = vcmask 1044480
  %v53 = vsel %vm51, %v46, 0
  %55 = vmatprep.subr.bf16.mxu0 0
  %56 = vmatpush1.bf16.msra.mxu0 0
  %57 = vmatprep.subr.bf16.mxu0 0
  %58 = vmatpush1.bf16.msra.mxu0 0
  %59 = vmatprep.subr.bf16.mxu0 0
  %60 = vmatpush1.bf16.msra.mxu0 0
  %61 = vmatprep.subr.bf16.mxu0 0
  %62 = vmatpush1.bf16.msra.mxu0 0
  %63 = vmatprep.subr.bf16.mxu0 0
  %64 = vmatpush1.bf16.msra.mxu0 0
  %65 = vmatprep.subr.bf16.mxu0 0
  %66 = vmatpush1.bf16.msra.mxu0 0
  %67 = vmatprep.subr.bf16.mxu0 0
  %68 = vmatpush1.bf16.msra.mxu0 0
  %69 = vmatprep.subr.bf16.mxu0 0
  %70 = vmatpush1.bf16.msra.mxu0 %v53
  %71 = vmatprep.subr.bf16.mxu0 0
  %72 = vmatpush2.bf16.msra.mxu0 0
  %73 = vmatprep.subr.bf16.mxu0 0
  %74 = vmatpush2.bf16.msra.mxu0 0
  %75 = vmatprep.subr.bf16.mxu0 0
  %76 = vmatpush2.bf16.msra.mxu0 0
  %77 = vmatprep.subr.bf16.mxu0 0
  %78 = vmatpush2.bf16.msra.mxu0 0
  %79 = vmatprep.subr.bf16.mxu0 0
  %80 = vmatpush2.bf16.msra.mxu0 0
  %81 = vmatprep.subr.bf16.mxu0 0
  %82 = vmatpush2.bf16.msra.mxu0 0
  %83 = vmatprep.subr.bf16.mxu0 0
  %84 = vmatpush2.bf16.msra.mxu0 0
  %85 = vmatprep.subr.bf16.mxu0 0
  %86 = vmatpush2.bf16.msra.mxu0 0
  %87 = vmatprep.mubr.bf16.mxu0 0
  %88 = vmatmul.mubr.bf16.gmra.mxu0 %v49
  %v89 = vpop.f32.mrf.mxu0
  %v90 = vadd.f32 0.0, %v89
  %v91 = vpop.f32.mrf.mxu0
  %v92 = vpop.f32.mrf.mxu0
  %v93 = vpop.f32.mrf.mxu0
  %94 = vdwg.mxu0
  %v95 = vld [vmem:[%s0] sm:$0xff]
  %v96 = vpack.c.bf16 %v95, %v95
  %v97 = vld [vmem:[%s3] sm:$0xf]
  %v98 = vld [vmem:[%s3 + $0x4] sm:$0xf]
  %v99 = vld [vmem:[%s3 + $0x8] sm:$0xf]
  %v100 = vld [vmem:[%s3 + $0xc] sm:$0xf]
  %v101 = vld [vmem:[%s3 + $0x10] sm:$0xf]
  %v102 = vld [vmem:[%s3 + $0x14] sm:$0xf]
  %v103 = vld [vmem:[%s3 + $0x18] sm:$0xf]
  %v104 = vld [vmem:[%s3 + $0x1c] sm:$0xf]
  %v105 = vld [vmem:[%s3 + $0x20] sm:$0xf]
  %v106 = vld [vmem:[%s3 + $0x24] sm:$0xf]
  %v107 = vld [vmem:[%s3 + $0x28] sm:$0xf]
  %v108 = vld [vmem:[%s3 + $0x2c] sm:$0xf]
  %v109 = vld [vmem:[%s3 + $0x30] sm:$0x3]
  %v123 = vunpack.c.l.b16 %v97
  %v124 = vunpack.c.l.b16 %v98
  %v125 = vunpack.c.l.b16 %v99
  %v126 = vunpack.c.l.b16 %v100
  %v127 = vunpack.c.l.b16 %v101
  %v128 = vunpack.c.l.b16 %v102
  %v129 = vunpack.c.l.b16 %v103
  %v130 = vunpack.c.l.b16 %v104
  %v131 = vunpack.c.l.b16 %v105
  %v132 = vunpack.c.l.b16 %v106
  %v133 = vunpack.c.l.b16 %v107
  %v134 = vunpack.c.l.b16 %v108
  %v135 = vunpack.c.l.b16 %v109
  %v136 = vpack.c.b16 %v124, %v123
  %v137 = vpack.c.b16 %v126, %v125
  %v138 = vpack.c.b16 %v128, %v127
  %v139 = vpack.c.b16 %v130, %v129
  %v140 = vpack.c.b16 %v132, %v131
  %v141 = vpack.c.b16 %v134, %v133
  %v142 = vpack.c.b16 %v135, %v135
  %vm149 = vcmask 818176
  %v151 = vsel %vm149, %v96, 0
  %vm153 = vcmask 1041408
  %v155 = vsel %vm153, %v142, 0
  %157 = vmatprep.subr.bf16.mxu0 0
  %158 = vmatpush1.bf16.msra.mxu0 0
  %159 = vmatprep.subr.bf16.mxu0 0
  %160 = vmatpush1.bf16.msra.mxu0 %v155
  %161 = vmatprep.subr.bf16.mxu0 0
  %162 = vmatpush1.bf16.msra.mxu0 %v141
  %163 = vmatprep.subr.bf16.mxu0 0
  %164 = vmatpush1.bf16.msra.mxu0 %v140
  %165 = vmatprep.subr.bf16.mxu0 0
  %166 = vmatpush1.bf16.msra.mxu0 %v139
  %167 = vmatprep.subr.bf16.mxu0 0
  %168 = vmatpush1.bf16.msra.mxu0 %v138
  %169 = vmatprep.subr.bf16.mxu0 0
  %170 = vmatpush1.bf16.msra.mxu0 %v137
  %171 = vmatprep.subr.bf16.mxu0 0
  %172 = vmatpush1.bf16.msra.mxu0 %v136
  %173 = vmatprep.subr.bf16.mxu0 0
  %174 = vmatpush2.bf16.msra.mxu0 0
  %175 = vmatprep.subr.bf16.mxu0 0
  %176 = vmatpush2.bf16.msra.mxu0 0
  %177 = vmatprep.subr.bf16.mxu0 0
  %178 = vmatpush2.bf16.msra.mxu0 0
  %179 = vmatprep.subr.bf16.mxu0 0
  %180 = vmatpush2.bf16.msra.mxu0 0
  %181 = vmatprep.subr.bf16.mxu0 0
  %182 = vmatpush2.bf16.msra.mxu0 0
  %183 = vmatprep.subr.bf16.mxu0 0
  %184 = vmatpush2.bf16.msra.mxu0 0
  %185 = vmatprep.subr.bf16.mxu0 0
  %186 = vmatpush2.bf16.msra.mxu0 0
  %187 = vmatprep.subr.bf16.mxu0 0
  %188 = vmatpush2.bf16.msra.mxu0 0
  %189 = vmatprep.mubr.bf16.mxu0 0
  %190 = vmatmul.mubr.bf16.gmra.mxu0 %v151
  %v191 = vpop.f32.mrf.mxu0
  %v192 = vadd.f32 %v90, %v191
  %v193 = vpop.f32.mrf.mxu0
  %v194 = vpop.f32.mrf.mxu0
  %v195 = vpop.f32.mrf.mxu0
  %196 = vdwg.mxu0
  %v197 = vmax.f32 %v192, 0.0
  %v198 = vpack.c.bf16 %v197, %v197
  %v199 = vld [vmem:[%s4] sm:$0xff]
  %v200 = vld [vmem:[%s4 + $0x8] sm:$0xff]
  %v201 = vld [vmem:[%s4 + $0x10] sm:$0xff]
  %v202 = vld [vmem:[%s4 + $0x18] sm:$0xff]
  %v203 = vld [vmem:[%s4 + $0x20] sm:$0xff]
  %v204 = vld [vmem:[%s4 + $0x28] sm:$0xff]
  %v205 = vld [vmem:[%s4 + $0x30] sm:$0xff]
  %v206 = vld [vmem:[%s4 + $0x38] sm:$0xff]
  %v207 = vld [vmem:[%s4 + $0x40] sm:$0xff]
  %v208 = vld [vmem:[%s4 + $0x48] sm:$0xff]
  %v209 = vld [vmem:[%s4 + $0x50] sm:$0xff]
  %v210 = vld [vmem:[%s4 + $0x58] sm:$0xff]
  %v211 = vld [vmem:[%s4 + $0x60] sm:$0xff]
  %v212 = vld [vmem:[%s4 + $0x68] sm:$0xff]
  %v213 = vld [vmem:[%s4 + $0x70] sm:$0xff]
  %v214 = vld [vmem:[%s4 + $0x78] sm:$0xff]
  %v215 = vld [vmem:[%s5] sm:$0x3]
  %v217 = vlaneseq
  %v218 = vshrl.u32 %v217, 7
  %v219 = vsub.s32 0, %v218
  %v220 = vrot.slane %v215, %v219
  %v221 = vlaneseq
  %v222 = vshrl.u32 %v221, 7
  %v223 = vsub.s32 1, %v222
  %v224 = vrot.slane %v215, %v223
  %v243 = vunpack.c.l.b16 %v199
  %v244 = vunpack.c.h.b16 %v199
  %v245 = vunpack.c.l.b16 %v200
  %v246 = vunpack.c.h.b16 %v200
  %v247 = vunpack.c.l.b16 %v201
  %v248 = vunpack.c.h.b16 %v201
  %v249 = vunpack.c.l.b16 %v202
  %v250 = vunpack.c.h.b16 %v202
  %v251 = vunpack.c.l.b16 %v203
  %v252 = vunpack.c.h.b16 %v203
  %v253 = vunpack.c.l.b16 %v204
  %v254 = vunpack.c.h.b16 %v204
  %v255 = vunpack.c.l.b16 %v205
  %v256 = vunpack.c.h.b16 %v205
  %v257 = vunpack.c.l.b16 %v206
  %v258 = vunpack.c.h.b16 %v206
  %v259 = vunpack.c.l.b16 %v207
  %v260 = vunpack.c.h.b16 %v207
  %v261 = vunpack.c.l.b16 %v208
  %v262 = vunpack.c.h.b16 %v208
  %v263 = vunpack.c.l.b16 %v209
  %v264 = vunpack.c.h.b16 %v209
  %v265 = vunpack.c.l.b16 %v210
  %v266 = vunpack.c.h.b16 %v210
  %v267 = vunpack.c.l.b16 %v211
  %v268 = vunpack.c.h.b16 %v211
  %v269 = vunpack.c.l.b16 %v212
  %v270 = vunpack.c.h.b16 %v212
  %v271 = vunpack.c.l.b16 %v213
  %v272 = vunpack.c.h.b16 %v213
  %v273 = vunpack.c.l.b16 %v214
  %v274 = vunpack.c.h.b16 %v214
  %v275 = vpack.c.b16 %v245, %v243
  %v276 = vpack.c.b16 %v246, %v244
  %v277 = vpack.c.b16 %v249, %v247
  %v278 = vpack.c.b16 %v250, %v248
  %v279 = vpack.c.b16 %v253, %v251
  %v280 = vpack.c.b16 %v254, %v252
  %v281 = vpack.c.b16 %v257, %v255
  %v282 = vpack.c.b16 %v258, %v256
  %v283 = vpack.c.b16 %v261, %v259
  %v284 = vpack.c.b16 %v262, %v260
  %v285 = vpack.c.b16 %v265, %v263
  %v286 = vpack.c.b16 %v266, %v264
  %v287 = vpack.c.b16 %v269, %v267
  %v288 = vpack.c.b16 %v270, %v268
  %v289 = vpack.c.b16 %v273, %v271
  %v290 = vpack.c.b16 %v274, %v272
  %307 = vmatprep.subr.bf16.mxu0 %v290
  %308 = vmatpush1.bf16.msra.mxu0 %v289
  %309 = vmatprep.subr.bf16.mxu0 %v288
  %310 = vmatpush1.bf16.msra.mxu0 %v287
  %311 = vmatprep.subr.bf16.mxu0 %v286
  %312 = vmatpush1.bf16.msra.mxu0 %v285
  %313 = vmatprep.subr.bf16.mxu0 %v284
  %314 = vmatpush1.bf16.msra.mxu0 %v283
  %315 = vmatprep.subr.bf16.mxu0 %v282
  %316 = vmatpush1.bf16.msra.mxu0 %v281
  %317 = vmatprep.subr.bf16.mxu0 %v280
  %318 = vmatpush1.bf16.msra.mxu0 %v279
  %319 = vmatprep.subr.bf16.mxu0 %v278
  %320 = vmatpush1.bf16.msra.mxu0 %v277
  %321 = vmatprep.subr.bf16.mxu0 %v276
  %322 = vmatpush1.bf16.msra.mxu0 %v275
  %323 = vmatprep.subr.bf16.mxu0 0
  %324 = vmatpush2.bf16.msra.mxu0 0
  %325 = vmatprep.subr.bf16.mxu0 0
  %326 = vmatpush2.bf16.msra.mxu0 0
  %327 = vmatprep.subr.bf16.mxu0 0
  %328 = vmatpush2.bf16.msra.mxu0 0
  %329 = vmatprep.subr.bf16.mxu0 0
  %330 = vmatpush2.bf16.msra.mxu0 0
  %331 = vmatprep.subr.bf16.mxu0 0
  %332 = vmatpush2.bf16.msra.mxu0 0
  %333 = vmatprep.subr.bf16.mxu0 0
  %334 = vmatpush2.bf16.msra.mxu0 0
  %335 = vmatprep.subr.bf16.mxu0 0
  %336 = vmatpush2.bf16.msra.mxu0 0
  %337 = vmatprep.subr.bf16.mxu0 0
  %338 = vmatpush2.bf16.msra.mxu0 0
  %339 = vmatprep.mubr.bf16.mxu0 0
  %340 = vmatmul.mubr.bf16.gmra.mxu0 %v198
  %v341 = vpop.f32.mrf.mxu0
  %v342 = vadd.f32 %v220, %v341
  %v343 = vpop.f32.mrf.mxu0
  %v344 = vadd.f32 %v224, %v343
  %v345 = vpop.f32.mrf.mxu0
  %v346 = vpop.f32.mrf.mxu0
  %347 = vdwg.mxu0
  %v348 = vmax.f32 %v342, 0.0
  %v349 = vmax.f32 %v344, 0.0
  %v350 = vpack.c.bf16 %v348, %v348
  %v351 = vpack.c.bf16 %v349, %v349
  %v352 = vld [vmem:[%s6] sm:$0xff]
  %v353 = vld [vmem:[%s6 + $0x8] sm:$0xff]
  %v354 = vld [vmem:[%s6 + $0x10] sm:$0xff]
  %v355 = vld [vmem:[%s6 + $0x18] sm:$0xf]
  %v356 = vld [vmem:[%s6 + $0x1c] sm:$0xff]
  %v357 = vld [vmem:[%s6 + $0x24] sm:$0xff]
  %v358 = vld [vmem:[%s6 + $0x2c] sm:$0xff]
  %v359 = vld [vmem:[%s6 + $0x34] sm:$0xf]
  %v360 = vld [vmem:[%s6 + $0x38] sm:$0xff]
  %v361 = vld [vmem:[%s6 + $0x40] sm:$0xff]
  %v362 = vld [vmem:[%s6 + $0x48] sm:$0xff]
  %v363 = vld [vmem:[%s6 + $0x50] sm:$0xf]
  %v364 = vld [vmem:[%s6 + $0x54] sm:$0xff]
  %v365 = vld [vmem:[%s6 + $0x5c] sm:$0xff]
  %v366 = vld [vmem:[%s6 + $0x64] sm:$0xff]
  %v367 = vld [vmem:[%s6 + $0x6c] sm:$0xf]
  %v368 = vld [vmem:[%s6 + $0x70] sm:$0xff]
  %v369 = vld [vmem:[%s6 + $0x78] sm:$0xff]
  %v370 = vld [vmem:[%s6 + $0x80] sm:$0xff]
  %v371 = vld [vmem:[%s6 + $0x88] sm:$0xf]
  %v372 = vld [vmem:[%s6 + $0x8c] sm:$0xff]
  %v373 = vld [vmem:[%s6 + $0x94] sm:$0xff]
  %v374 = vld [vmem:[%s6 + $0x9c] sm:$0xff]
  %v375 = vld [vmem:[%s6 + $0xa4] sm:$0xf]
  %v376 = vld [vmem:[%s6 + $0xa8] sm:$0xff]
  %v377 = vld [vmem:[%s6 + $0xb0] sm:$0xff]
  %v378 = vld [vmem:[%s6 + $0xb8] sm:$0xff]
  %v379 = vld [vmem:[%s6 + $0xc0] sm:$0xf]
  %v380 = vld [vmem:[%s6 + $0xc4] sm:$0xff]
  %v381 = vld [vmem:[%s6 + $0xcc] sm:$0xff]
  %v382 = vld [vmem:[%s6 + $0xd4] sm:$0xff]
  %v383 = vld [vmem:[%s6 + $0xdc] sm:$0xf]
  %v384 = vld [vmem:[%s6 + $0xe0] sm:$0xff]
  %v385 = vld [vmem:[%s6 + $0xe8] sm:$0xff]
  %v386 = vld [vmem:[%s6 + $0xf0] sm:$0xff]
  %v387 = vld [vmem:[%s6 + $0xf8] sm:$0xf]
  %v388 = vld [vmem:[%s6 + $0xfc] sm:$0xff]
  %v389 = vld [vmem:[%s6 + $0x104] sm:$0xff]
  %v390 = vld [vmem:[%s6 + $0x10c] sm:$0xff]
  %v391 = vld [vmem:[%s6 + $0x114] sm:$0xf]
  %v392 = vld [vmem:[%s6 + $0x118] sm:$0xff]
  %v393 = vld [vmem:[%s6 + $0x120] sm:$0xff]
  %v394 = vld [vmem:[%s6 + $0x128] sm:$0xff]
  %v395 = vld [vmem:[%s6 + $0x130] sm:$0xf]
  %v396 = vld [vmem:[%s6 + $0x134] sm:$0xff]
  %v397 = vld [vmem:[%s6 + $0x13c] sm:$0xff]
  %v398 = vld [vmem:[%s6 + $0x144] sm:$0xff]
  %v399 = vld [vmem:[%s6 + $0x14c] sm:$0xf]
  %v400 = vld [vmem:[%s6 + $0x150] sm:$0xff]
  %v401 = vld [vmem:[%s6 + $0x158] sm:$0xff]
  %v402 = vld [vmem:[%s6 + $0x160] sm:$0xff]
  %v403 = vld [vmem:[%s6 + $0x168] sm:$0xf]
  %v404 = vld [vmem:[%s6 + $0x16c] sm:$0xff]
  %v405 = vld [vmem:[%s6 + $0x174] sm:$0xff]
  %v406 = vld [vmem:[%s6 + $0x17c] sm:$0xff]
  %v407 = vld [vmem:[%s6 + $0x184] sm:$0xf]
  %v408 = vld [vmem:[%s6 + $0x188] sm:$0xff]
  %v409 = vld [vmem:[%s6 + $0x190] sm:$0xff]
  %v410 = vld [vmem:[%s6 + $0x198] sm:$0xff]
  %v411 = vld [vmem:[%s6 + $0x1a0] sm:$0xf]
  %v412 = vld [vmem:[%s6 + $0x1a4] sm:$0xff]
  %v413 = vld [vmem:[%s6 + $0x1ac] sm:$0xff]
  %v414 = vld [vmem:[%s6 + $0x1b4] sm:$0xff]
  %v415 = vld [vmem:[%s6 + $0x1bc] sm:$0xf]
  %v416 = vld [vmem:[%s6 + $0x1c0] sm:$0xff]
  %v417 = vld [vmem:[%s6 + $0x1c8] sm:$0xff]
  %v418 = vld [vmem:[%s6 + $0x1d0] sm:$0xff]
  %v419 = vld [vmem:[%s6 + $0x1d8] sm:$0xf]
  %v420 = vld [vmem:[%s6 + $0x1dc] sm:$0xff]
  %v421 = vld [vmem:[%s6 + $0x1e4] sm:$0xff]
  %v422 = vld [vmem:[%s6 + $0x1ec] sm:$0xff]
  %v423 = vld [vmem:[%s6 + $0x1f4] sm:$0xf]
  %v424 = vld [vmem:[%s6 + $0x1f8] sm:$0xff]
  %v425 = vld [vmem:[%s6 + $0x200] sm:$0xff]
  %v426 = vld [vmem:[%s6 + $0x208] sm:$0xff]
  %v427 = vld [vmem:[%s6 + $0x210] sm:$0xf]
  %v428 = vld [vmem:[%s6 + $0x214] sm:$0xff]
  %v429 = vld [vmem:[%s6 + $0x21c] sm:$0xff]
  %v430 = vld [vmem:[%s6 + $0x224] sm:$0xff]
  %v431 = vld [vmem:[%s6 + $0x22c] sm:$0xf]
  %v432 = vld [vmem:[%s6 + $0x230] sm:$0xff]
  %v433 = vld [vmem:[%s6 + $0x238] sm:$0xff]
  %v434 = vld [vmem:[%s6 + $0x240] sm:$0xff]
  %v435 = vld [vmem:[%s6 + $0x248] sm:$0xf]
  %v436 = vld [vmem:[%s6 + $0x24c] sm:$0xff]
  %v437 = vld [vmem:[%s6 + $0x254] sm:$0xff]
  %v438 = vld [vmem:[%s6 + $0x25c] sm:$0xff]
  %v439 = vld [vmem:[%s6 + $0x264] sm:$0xf]
  %v440 = vld [vmem:[%s6 + $0x268] sm:$0xff]
  %v441 = vld [vmem:[%s6 + $0x270] sm:$0xff]
  %v442 = vld [vmem:[%s6 + $0x278] sm:$0xff]
  %v443 = vld [vmem:[%s6 + $0x280] sm:$0xf]
  %v444 = vld [vmem:[%s6 + $0x284] sm:$0xff]
  %v445 = vld [vmem:[%s6 + $0x28c] sm:$0xff]
  %v446 = vld [vmem:[%s6 + $0x294] sm:$0xff]
  %v447 = vld [vmem:[%s6 + $0x29c] sm:$0xf]
  %v448 = vld [vmem:[%s6 + $0x2a0] sm:$0xff]
  %v449 = vld [vmem:[%s6 + $0x2a8] sm:$0xff]
  %v450 = vld [vmem:[%s6 + $0x2b0] sm:$0xff]
  %v451 = vld [vmem:[%s6 + $0x2b8] sm:$0xf]
  %v452 = vld [vmem:[%s6 + $0x2bc] sm:$0xff]
  %v453 = vld [vmem:[%s6 + $0x2c4] sm:$0xff]
  %v454 = vld [vmem:[%s6 + $0x2cc] sm:$0xff]
  %v455 = vld [vmem:[%s6 + $0x2d4] sm:$0xf]
  %v456 = vld [vmem:[%s6 + $0x2d8] sm:$0xff]
  %v457 = vld [vmem:[%s6 + $0x2e0] sm:$0xff]
  %v458 = vld [vmem:[%s6 + $0x2e8] sm:$0xff]
  %v459 = vld [vmem:[%s6 + $0x2f0] sm:$0xf]
  %v460 = vld [vmem:[%s6 + $0x2f4] sm:$0xff]
  %v461 = vld [vmem:[%s6 + $0x2fc] sm:$0xff]
  %v462 = vld [vmem:[%s6 + $0x304] sm:$0xff]
  %v463 = vld [vmem:[%s6 + $0x30c] sm:$0xf]
  %v464 = vld [vmem:[%s6 + $0x310] sm:$0xff]
  %v465 = vld [vmem:[%s6 + $0x318] sm:$0xff]
  %v466 = vld [vmem:[%s6 + $0x320] sm:$0xff]
  %v467 = vld [vmem:[%s6 + $0x328] sm:$0xf]
  %v468 = vld [vmem:[%s6 + $0x32c] sm:$0xff]
  %v469 = vld [vmem:[%s6 + $0x334] sm:$0xff]
  %v470 = vld [vmem:[%s6 + $0x33c] sm:$0xff]
  %v471 = vld [vmem:[%s6 + $0x344] sm:$0xf]
  %v472 = vld [vmem:[%s6 + $0x348] sm:$0xff]
  %v473 = vld [vmem:[%s6 + $0x350] sm:$0xff]
  %v474 = vld [vmem:[%s6 + $0x358] sm:$0xff]
  %v475 = vld [vmem:[%s6 + $0x360] sm:$0xf]
  %v476 = vld [vmem:[%s6 + $0x364] sm:$0xff]
  %v477 = vld [vmem:[%s6 + $0x36c] sm:$0xff]
  %v478 = vld [vmem:[%s6 + $0x374] sm:$0xff]
  %v479 = vld [vmem:[%s6 + $0x37c] sm:$0xf]
  %v480 = vld [vmem:[%s7] sm:$0x7f]
  %v482 = vlaneseq
  %v483 = vshrl.u32 %v482, 7
  %v484 = vsub.s32 0, %v483
  %v485 = vrot.slane %v480, %v484
  %v486 = vlaneseq
  %v487 = vshrl.u32 %v486, 7
  %v488 = vsub.s32 1, %v487
  %v489 = vrot.slane %v480, %v488
  %v490 = vlaneseq
  %v491 = vshrl.u32 %v490, 7
  %v492 = vsub.s32 2, %v491
  %v493 = vrot.slane %v480, %v492
  %v494 = vlaneseq
  %v495 = vshrl.u32 %v494, 7
  %v496 = vsub.s32 3, %v495
  %v497 = vrot.slane %v480, %v496
  %v498 = vlaneseq
  %v499 = vshrl.u32 %v498, 7
  %v500 = vsub.s32 4, %v499
  %v501 = vrot.slane %v480, %v500
  %v502 = vlaneseq
  %v503 = vshrl.u32 %v502, 7
  %v504 = vsub.s32 5, %v503
  %v505 = vrot.slane %v480, %v504
  %v506 = vlaneseq
  %v507 = vshrl.u32 %v506, 7
  %v508 = vsub.s32 6, %v507
  %v509 = vrot.slane %v480, %v508
  %v645 = vunpack.c.l.b16 %v352
  %v646 = vunpack.c.h.b16 %v352
  %v647 = vunpack.c.l.b16 %v353
  %v648 = vunpack.c.h.b16 %v353
  %v649 = vunpack.c.l.b16 %v354
  %v650 = vunpack.c.h.b16 %v354
  %v651 = vunpack.c.l.b16 %v355
  %v652 = vunpack.c.l.b16 %v356
  %v653 = vunpack.c.h.b16 %v356
  %v654 = vunpack.c.l.b16 %v357
  %v655 = vunpack.c.h.b16 %v357
  %v656 = vunpack.c.l.b16 %v358
  %v657 = vunpack.c.h.b16 %v358
  %v658 = vunpack.c.l.b16 %v359
  %v659 = vunpack.c.l.b16 %v360
  %v660 = vunpack.c.h.b16 %v360
  %v661 = vunpack.c.l.b16 %v361
  %v662 = vunpack.c.h.b16 %v361
  %v663 = vunpack.c.l.b16 %v362
  %v664 = vunpack.c.h.b16 %v362
  %v665 = vunpack.c.l.b16 %v363
  %v666 = vunpack.c.l.b16 %v364
  %v667 = vunpack.c.h.b16 %v364
  %v668 = vunpack.c.l.b16 %v365
  %v669 = vunpack.c.h.b16 %v365
  %v670 = vunpack.c.l.b16 %v366
  %v671 = vunpack.c.h.b16 %v366
  %v672 = vunpack.c.l.b16 %v367
  %v673 = vunpack.c.l.b16 %v368
  %v674 = vunpack.c.h.b16 %v368
  %v675 = vunpack.c.l.b16 %v369
  %v676 = vunpack.c.h.b16 %v369
  %v677 = vunpack.c.l.b16 %v370
  %v678 = vunpack.c.h.b16 %v370
  %v679 = vunpack.c.l.b16 %v371
  %v680 = vunpack.c.l.b16 %v372
  %v681 = vunpack.c.h.b16 %v372
  %v682 = vunpack.c.l.b16 %v373
  %v683 = vunpack.c.h.b16 %v373
  %v684 = vunpack.c.l.b16 %v374
  %v685 = vunpack.c.h.b16 %v374
  %v686 = vunpack.c.l.b16 %v375
  %v687 = vunpack.c.l.b16 %v376
  %v688 = vunpack.c.h.b16 %v376
  %v689 = vunpack.c.l.b16 %v377
  %v690 = vunpack.c.h.b16 %v377
  %v691 = vunpack.c.l.b16 %v378
  %v692 = vunpack.c.h.b16 %v378
  %v693 = vunpack.c.l.b16 %v379
  %v694 = vunpack.c.l.b16 %v380
  %v695 = vunpack.c.h.b16 %v380
  %v696 = vunpack.c.l.b16 %v381
  %v697 = vunpack.c.h.b16 %v381
  %v698 = vunpack.c.l.b16 %v382
  %v699 = vunpack.c.h.b16 %v382
  %v700 = vunpack.c.l.b16 %v383
  %v701 = vunpack.c.l.b16 %v384
  %v702 = vunpack.c.h.b16 %v384
  %v703 = vunpack.c.l.b16 %v385
  %v704 = vunpack.c.h.b16 %v385
  %v705 = vunpack.c.l.b16 %v386
  %v706 = vunpack.c.h.b16 %v386
  %v707 = vunpack.c.l.b16 %v387
  %v708 = vunpack.c.l.b16 %v388
  %v709 = vunpack.c.h.b16 %v388
  %v710 = vunpack.c.l.b16 %v389
  %v711 = vunpack.c.h.b16 %v389
  %v712 = vunpack.c.l.b16 %v390
  %v713 = vunpack.c.h.b16 %v390
  %v714 = vunpack.c.l.b16 %v391
  %v715 = vunpack.c.l.b16 %v392
  %v716 = vunpack.c.h.b16 %v392
  %v717 = vunpack.c.l.b16 %v393
  %v718 = vunpack.c.h.b16 %v393
  %v719 = vunpack.c.l.b16 %v394
  %v720 = vunpack.c.h.b16 %v394
  %v721 = vunpack.c.l.b16 %v395
  %v722 = vunpack.c.l.b16 %v396
  %v723 = vunpack.c.h.b16 %v396
  %v724 = vunpack.c.l.b16 %v397
  %v725 = vunpack.c.h.b16 %v397
  %v726 = vunpack.c.l.b16 %v398
  %v727 = vunpack.c.h.b16 %v398
  %v728 = vunpack.c.l.b16 %v399
  %v729 = vunpack.c.l.b16 %v400
  %v730 = vunpack.c.h.b16 %v400
  %v731 = vunpack.c.l.b16 %v401
  %v732 = vunpack.c.h.b16 %v401
  %v733 = vunpack.c.l.b16 %v402
  %v734 = vunpack.c.h.b16 %v402
  %v735 = vunpack.c.l.b16 %v403
  %v736 = vunpack.c.l.b16 %v404
  %v737 = vunpack.c.h.b16 %v404
  %v738 = vunpack.c.l.b16 %v405
  %v739 = vunpack.c.h.b16 %v405
  %v740 = vunpack.c.l.b16 %v406
  %v741 = vunpack.c.h.b16 %v406
  %v742 = vunpack.c.l.b16 %v407
  %v743 = vunpack.c.l.b16 %v408
  %v744 = vunpack.c.h.b16 %v408
  %v745 = vunpack.c.l.b16 %v409
  %v746 = vunpack.c.h.b16 %v409
  %v747 = vunpack.c.l.b16 %v410
  %v748 = vunpack.c.h.b16 %v410
  %v749 = vunpack.c.l.b16 %v411
  %v750 = vunpack.c.l.b16 %v412
  %v751 = vunpack.c.h.b16 %v412
  %v752 = vunpack.c.l.b16 %v413
  %v753 = vunpack.c.h.b16 %v413
  %v754 = vunpack.c.l.b16 %v414
  %v755 = vunpack.c.h.b16 %v414
  %v756 = vunpack.c.l.b16 %v415
  %v757 = vunpack.c.l.b16 %v416
  %v758 = vunpack.c.h.b16 %v416
  %v759 = vunpack.c.l.b16 %v417
  %v760 = vunpack.c.h.b16 %v417
  %v761 = vunpack.c.l.b16 %v418
  %v762 = vunpack.c.h.b16 %v418
  %v763 = vunpack.c.l.b16 %v419
  %v764 = vunpack.c.l.b16 %v420
  %v765 = vunpack.c.h.b16 %v420
  %v766 = vunpack.c.l.b16 %v421
  %v767 = vunpack.c.h.b16 %v421
  %v768 = vunpack.c.l.b16 %v422
  %v769 = vunpack.c.h.b16 %v422
  %v770 = vunpack.c.l.b16 %v423
  %v771 = vunpack.c.l.b16 %v424
  %v772 = vunpack.c.h.b16 %v424
  %v773 = vunpack.c.l.b16 %v425
  %v774 = vunpack.c.h.b16 %v425
  %v775 = vunpack.c.l.b16 %v426
  %v776 = vunpack.c.h.b16 %v426
  %v777 = vunpack.c.l.b16 %v427
  %v778 = vunpack.c.l.b16 %v428
  %v779 = vunpack.c.h.b16 %v428
  %v780 = vunpack.c.l.b16 %v429
  %v781 = vunpack.c.h.b16 %v429
  %v782 = vunpack.c.l.b16 %v430
  %v783 = vunpack.c.h.b16 %v430
  %v784 = vunpack.c.l.b16 %v431
  %v785 = vunpack.c.l.b16 %v432
  %v786 = vunpack.c.h.b16 %v432
  %v787 = vunpack.c.l.b16 %v433
  %v788 = vunpack.c.h.b16 %v433
  %v789 = vunpack.c.l.b16 %v434
  %v790 = vunpack.c.h.b16 %v434
  %v791 = vunpack.c.l.b16 %v435
  %v792 = vunpack.c.l.b16 %v436
  %v793 = vunpack.c.h.b16 %v436
  %v794 = vunpack.c.l.b16 %v437
  %v795 = vunpack.c.h.b16 %v437
  %v796 = vunpack.c.l.b16 %v438
  %v797 = vunpack.c.h.b16 %v438
  %v798 = vunpack.c.l.b16 %v439
  %v799 = vunpack.c.l.b16 %v440
  %v800 = vunpack.c.h.b16 %v440
  %v801 = vunpack.c.l.b16 %v441
  %v802 = vunpack.c.h.b16 %v441
  %v803 = vunpack.c.l.b16 %v442
  %v804 = vunpack.c.h.b16 %v442
  %v805 = vunpack.c.l.b16 %v443
  %v806 = vunpack.c.l.b16 %v444
  %v807 = vunpack.c.h.b16 %v444
  %v808 = vunpack.c.l.b16 %v445
  %v809 = vunpack.c.h.b16 %v445
  %v810 = vunpack.c.l.b16 %v446
  %v811 = vunpack.c.h.b16 %v446
  %v812 = vunpack.c.l.b16 %v447
  %v813 = vunpack.c.l.b16 %v448
  %v814 = vunpack.c.h.b16 %v448
  %v815 = vunpack.c.l.b16 %v449
  %v816 = vunpack.c.h.b16 %v449
  %v817 = vunpack.c.l.b16 %v450
  %v818 = vunpack.c.h.b16 %v450
  %v819 = vunpack.c.l.b16 %v451
  %v820 = vunpack.c.l.b16 %v452
  %v821 = vunpack.c.h.b16 %v452
  %v822 = vunpack.c.l.b16 %v453
  %v823 = vunpack.c.h.b16 %v453
  %v824 = vunpack.c.l.b16 %v454
  %v825 = vunpack.c.h.b16 %v454
  %v826 = vunpack.c.l.b16 %v455
  %v827 = vunpack.c.l.b16 %v456
  %v828 = vunpack.c.h.b16 %v456
  %v829 = vunpack.c.l.b16 %v457
  %v830 = vunpack.c.h.b16 %v457
  %v831 = vunpack.c.l.b16 %v458
  %v832 = vunpack.c.h.b16 %v458
  %v833 = vunpack.c.l.b16 %v459
  %v834 = vunpack.c.l.b16 %v460
  %v835 = vunpack.c.h.b16 %v460
  %v836 = vunpack.c.l.b16 %v461
  %v837 = vunpack.c.h.b16 %v461
  %v838 = vunpack.c.l.b16 %v462
  %v839 = vunpack.c.h.b16 %v462
  %v840 = vunpack.c.l.b16 %v463
  %v841 = vunpack.c.l.b16 %v464
  %v842 = vunpack.c.h.b16 %v464
  %v843 = vunpack.c.l.b16 %v465
  %v844 = vunpack.c.h.b16 %v465
  %v845 = vunpack.c.l.b16 %v466
  %v846 = vunpack.c.h.b16 %v466
  %v847 = vunpack.c.l.b16 %v467
  %v848 = vunpack.c.l.b16 %v468
  %v849 = vunpack.c.h.b16 %v468
  %v850 = vunpack.c.l.b16 %v469
  %v851 = vunpack.c.h.b16 %v469
  %v852 = vunpack.c.l.b16 %v470
  %v853 = vunpack.c.h.b16 %v470
  %v854 = vunpack.c.l.b16 %v471
  %v855 = vunpack.c.l.b16 %v472
  %v856 = vunpack.c.h.b16 %v472
  %v857 = vunpack.c.l.b16 %v473
  %v858 = vunpack.c.h.b16 %v473
  %v859 = vunpack.c.l.b16 %v474
  %v860 = vunpack.c.h.b16 %v474
  %v861 = vunpack.c.l.b16 %v475
  %v862 = vunpack.c.l.b16 %v476
  %v863 = vunpack.c.h.b16 %v476
  %v864 = vunpack.c.l.b16 %v477
  %v865 = vunpack.c.h.b16 %v477
  %v866 = vunpack.c.l.b16 %v478
  %v867 = vunpack.c.h.b16 %v478
  %v868 = vunpack.c.l.b16 %v479
  %v869 = vpack.c.b16 %v652, %v645
  %v870 = vpack.c.b16 %v653, %v646
  %v871 = vpack.c.b16 %v654, %v647
  %v872 = vpack.c.b16 %v655, %v648
  %v873 = vpack.c.b16 %v656, %v649
  %v874 = vpack.c.b16 %v657, %v650
  %v875 = vpack.c.b16 %v658, %v651
  %v876 = vpack.c.b16 %v666, %v659
  %v877 = vpack.c.b16 %v667, %v660
  %v878 = vpack.c.b16 %v668, %v661
  %v879 = vpack.c.b16 %v669, %v662
  %v880 = vpack.c.b16 %v670, %v663
  %v881 = vpack.c.b16 %v671, %v664
  %v882 = vpack.c.b16 %v672, %v665
  %v883 = vpack.c.b16 %v680, %v673
  %v884 = vpack.c.b16 %v681, %v674
  %v885 = vpack.c.b16 %v682, %v675
  %v886 = vpack.c.b16 %v683, %v676
  %v887 = vpack.c.b16 %v684, %v677
  %v888 = vpack.c.b16 %v685, %v678
  %v889 = vpack.c.b16 %v686, %v679
  %v890 = vpack.c.b16 %v694, %v687
  %v891 = vpack.c.b16 %v695, %v688
  %v892 = vpack.c.b16 %v696, %v689
  %v893 = vpack.c.b16 %v697, %v690
  %v894 = vpack.c.b16 %v698, %v691
  %v895 = vpack.c.b16 %v699, %v692
  %v896 = vpack.c.b16 %v700, %v693
  %v897 = vpack.c.b16 %v708, %v701
  %v898 = vpack.c.b16 %v709, %v702
  %v899 = vpack.c.b16 %v710, %v703
  %v900 = vpack.c.b16 %v711, %v704
  %v901 = vpack.c.b16 %v712, %v705
  %v902 = vpack.c.b16 %v713, %v706
  %v903 = vpack.c.b16 %v714, %v707
  %v904 = vpack.c.b16 %v722, %v715
  %v905 = vpack.c.b16 %v723, %v716
  %v906 = vpack.c.b16 %v724, %v717
  %v907 = vpack.c.b16 %v725, %v718
  %v908 = vpack.c.b16 %v726, %v719
  %v909 = vpack.c.b16 %v727, %v720
  %v910 = vpack.c.b16 %v728, %v721
  %v911 = vpack.c.b16 %v736, %v729
  %v912 = vpack.c.b16 %v737, %v730
  %v913 = vpack.c.b16 %v738, %v731
  %v914 = vpack.c.b16 %v739, %v732
  %v915 = vpack.c.b16 %v740, %v733
  %v916 = vpack.c.b16 %v741, %v734
  %v917 = vpack.c.b16 %v742, %v735
  %v918 = vpack.c.b16 %v750, %v743
  %v919 = vpack.c.b16 %v751, %v744
  %v920 = vpack.c.b16 %v752, %v745
  %v921 = vpack.c.b16 %v753, %v746
  %v922 = vpack.c.b16 %v754, %v747
  %v923 = vpack.c.b16 %v755, %v748
  %v924 = vpack.c.b16 %v756, %v749
  %v925 = vpack.c.b16 %v764, %v757
  %v926 = vpack.c.b16 %v765, %v758
  %v927 = vpack.c.b16 %v766, %v759
  %v928 = vpack.c.b16 %v767, %v760
  %v929 = vpack.c.b16 %v768, %v761
  %v930 = vpack.c.b16 %v769, %v762
  %v931 = vpack.c.b16 %v770, %v763
  %v932 = vpack.c.b16 %v778, %v771
  %v933 = vpack.c.b16 %v779, %v772
  %v934 = vpack.c.b16 %v780, %v773
  %v935 = vpack.c.b16 %v781, %v774
  %v936 = vpack.c.b16 %v782, %v775
  %v937 = vpack.c.b16 %v783, %v776
  %v938 = vpack.c.b16 %v784, %v777
  %v939 = vpack.c.b16 %v792, %v785
  %v940 = vpack.c.b16 %v793, %v786
  %v941 = vpack.c.b16 %v794, %v787
  %v942 = vpack.c.b16 %v795, %v788
  %v943 = vpack.c.b16 %v796, %v789
  %v944 = vpack.c.b16 %v797, %v790
  %v945 = vpack.c.b16 %v798, %v791
  %v946 = vpack.c.b16 %v806, %v799
  %v947 = vpack.c.b16 %v807, %v800
  %v948 = vpack.c.b16 %v808, %v801
  %v949 = vpack.c.b16 %v809, %v802
  %v950 = vpack.c.b16 %v810, %v803
  %v951 = vpack.c.b16 %v811, %v804
  %v952 = vpack.c.b16 %v812, %v805
  %v953 = vpack.c.b16 %v820, %v813
  %v954 = vpack.c.b16 %v821, %v814
  %v955 = vpack.c.b16 %v822, %v815
  %v956 = vpack.c.b16 %v823, %v816
  %v957 = vpack.c.b16 %v824, %v817
  %v958 = vpack.c.b16 %v825, %v818
  %v959 = vpack.c.b16 %v826, %v819
  %v960 = vpack.c.b16 %v834, %v827
  %v961 = vpack.c.b16 %v835, %v828
  %v962 = vpack.c.b16 %v836, %v829
  %v963 = vpack.c.b16 %v837, %v830
  %v964 = vpack.c.b16 %v838, %v831
  %v965 = vpack.c.b16 %v839, %v832
  %v966 = vpack.c.b16 %v840, %v833
  %v967 = vpack.c.b16 %v848, %v841
  %v968 = vpack.c.b16 %v849, %v842
  %v969 = vpack.c.b16 %v850, %v843
  %v970 = vpack.c.b16 %v851, %v844
  %v971 = vpack.c.b16 %v852, %v845
  %v972 = vpack.c.b16 %v853, %v846
  %v973 = vpack.c.b16 %v854, %v847
  %v974 = vpack.c.b16 %v862, %v855
  %v975 = vpack.c.b16 %v863, %v856
  %v976 = vpack.c.b16 %v864, %v857
  %v977 = vpack.c.b16 %v865, %v858
  %v978 = vpack.c.b16 %v866, %v859
  %v979 = vpack.c.b16 %v867, %v860
  %v980 = vpack.c.b16 %v868, %v861
  %1093 = vmatprep.subr.bf16.mxu0 %v919
  %1094 = vmatpush1.bf16.msra.mxu0 %v918
  %1095 = vmatprep.subr.bf16.mxu0 %v912
  %1096 = vmatpush1.bf16.msra.mxu0 %v911
  %1097 = vmatprep.subr.bf16.mxu0 %v905
  %1098 = vmatpush1.bf16.msra.mxu0 %v904
  %1099 = vmatprep.subr.bf16.mxu0 %v898
  %1100 = vmatpush1.bf16.msra.mxu0 %v897
  %1101 = vmatprep.subr.bf16.mxu0 %v891
  %1102 = vmatpush1.bf16.msra.mxu0 %v890
  %1103 = vmatprep.subr.bf16.mxu0 %v884
  %1104 = vmatpush1.bf16.msra.mxu0 %v883
  %1105 = vmatprep.subr.bf16.mxu0 %v877
  %1106 = vmatpush1.bf16.msra.mxu0 %v876
  %1107 = vmatprep.subr.bf16.mxu0 %v870
  %1108 = vmatpush1.bf16.msra.mxu0 %v869
  %1109 = vmatprep.subr.bf16.mxu0 %v975
  %1110 = vmatpush2.bf16.msra.mxu0 %v974
  %1111 = vmatprep.subr.bf16.mxu0 %v968
  %1112 = vmatpush2.bf16.msra.mxu0 %v967
  %1113 = vmatprep.subr.bf16.mxu0 %v961
  %1114 = vmatpush2.bf16.msra.mxu0 %v960
  %1115 = vmatprep.subr.bf16.mxu0 %v954
  %1116 = vmatpush2.bf16.msra.mxu0 %v953
  %1117 = vmatprep.subr.bf16.mxu0 %v947
  %1118 = vmatpush2.bf16.msra.mxu0 %v946
  %1119 = vmatprep.subr.bf16.mxu0 %v940
  %1120 = vmatpush2.bf16.msra.mxu0 %v939
  %1121 = vmatprep.subr.bf16.mxu0 %v933
  %1122 = vmatpush2.bf16.msra.mxu0 %v932
  %1123 = vmatprep.subr.bf16.mxu0 %v926
  %1124 = vmatpush2.bf16.msra.mxu0 %v925
  %1125 = vmatprep.mubr.bf16.mxu0 %v351
  %1126 = vmatmul.mubr.bf16.gmra.mxu0 %v350
  %v1127 = vpop.f32.mrf.mxu0
  %v1128 = vadd.f32 %v485, %v1127
  %v1129 = vpop.f32.mrf.mxu0
  %v1130 = vadd.f32 %v489, %v1129
  %v1131 = vpop.f32.mrf.mxu0
  %v1132 = vpop.f32.mrf.mxu0
  %1133 = vdwg.mxu0
  %1134 = vmatprep.subr.bf16.mxu0 %v921
  %1135 = vmatpush1.bf16.msra.mxu0 %v920
  %1136 = vmatprep.subr.bf16.mxu0 %v914
  %1137 = vmatpush1.bf16.msra.mxu0 %v913
  %1138 = vmatprep.subr.bf16.mxu0 %v907
  %1139 = vmatpush1.bf16.msra.mxu0 %v906
  %1140 = vmatprep.subr.bf16.mxu0 %v900
  %1141 = vmatpush1.bf16.msra.mxu0 %v899
  %1142 = vmatprep.subr.bf16.mxu0 %v893
  %1143 = vmatpush1.bf16.msra.mxu0 %v892
  %1144 = vmatprep.subr.bf16.mxu0 %v886
  %1145 = vmatpush1.bf16.msra.mxu0 %v885
  %1146 = vmatprep.subr.bf16.mxu0 %v879
  %1147 = vmatpush1.bf16.msra.mxu0 %v878
  %1148 = vmatprep.subr.bf16.mxu0 %v872
  %1149 = vmatpush1.bf16.msra.mxu0 %v871
  %1150 = vmatprep.subr.bf16.mxu0 %v977
  %1151 = vmatpush2.bf16.msra.mxu0 %v976
  %1152 = vmatprep.subr.bf16.mxu0 %v970
  %1153 = vmatpush2.bf16.msra.mxu0 %v969
  %1154 = vmatprep.subr.bf16.mxu0 %v963
  %1155 = vmatpush2.bf16.msra.mxu0 %v962
  %1156 = vmatprep.subr.bf16.mxu0 %v956
  %1157 = vmatpush2.bf16.msra.mxu0 %v955
  %1158 = vmatprep.subr.bf16.mxu0 %v949
  %1159 = vmatpush2.bf16.msra.mxu0 %v948
  %1160 = vmatprep.subr.bf16.mxu0 %v942
  %1161 = vmatpush2.bf16.msra.mxu0 %v941
  %1162 = vmatprep.subr.bf16.mxu0 %v935
  %1163 = vmatpush2.bf16.msra.mxu0 %v934
  %1164 = vmatprep.subr.bf16.mxu0 %v928
  %1165 = vmatpush2.bf16.msra.mxu0 %v927
  %1166 = vmatprep.mubr.bf16.mxu0 %v351
  %1167 = vmatmul.mubr.bf16.gmra.mxu0 %v350
  %v1168 = vpop.f32.mrf.mxu0
  %v1169 = vadd.f32 %v493, %v1168
  %v1170 = vpop.f32.mrf.mxu0
  %v1171 = vadd.f32 %v497, %v1170
  %v1172 = vpop.f32.mrf.mxu0
  %v1173 = vpop.f32.mrf.mxu0
  %1174 = vdwg.mxu0
  %1175 = vmatprep.subr.bf16.mxu0 %v923
  %1176 = vmatpush1.bf16.msra.mxu0 %v922
  %1177 = vmatprep.subr.bf16.mxu0 %v916
  %1178 = vmatpush1.bf16.msra.mxu0 %v915
  %1179 = vmatprep.subr.bf16.mxu0 %v909
  %1180 = vmatpush1.bf16.msra.mxu0 %v908
  %1181 = vmatprep.subr.bf16.mxu0 %v902
  %1182 = vmatpush1.bf16.msra.mxu0 %v901
  %1183 = vmatprep.subr.bf16.mxu0 %v895
  %1184 = vmatpush1.bf16.msra.mxu0 %v894
  %1185 = vmatprep.subr.bf16.mxu0 %v888
  %1186 = vmatpush1.bf16.msra.mxu0 %v887
  %1187 = vmatprep.subr.bf16.mxu0 %v881
  %1188 = vmatpush1.bf16.msra.mxu0 %v880
  %1189 = vmatprep.subr.bf16.mxu0 %v874
  %1190 = vmatpush1.bf16.msra.mxu0 %v873
  %1191 = vmatprep.subr.bf16.mxu0 %v979
  %1192 = vmatpush2.bf16.msra.mxu0 %v978
  %1193 = vmatprep.subr.bf16.mxu0 %v972
  %1194 = vmatpush2.bf16.msra.mxu0 %v971
  %1195 = vmatprep.subr.bf16.mxu0 %v965
  %1196 = vmatpush2.bf16.msra.mxu0 %v964
  %1197 = vmatprep.subr.bf16.mxu0 %v958
  %1198 = vmatpush2.bf16.msra.mxu0 %v957
  %1199 = vmatprep.subr.bf16.mxu0 %v951
  %1200 = vmatpush2.bf16.msra.mxu0 %v950
  %1201 = vmatprep.subr.bf16.mxu0 %v944
  %1202 = vmatpush2.bf16.msra.mxu0 %v943
  %1203 = vmatprep.subr.bf16.mxu0 %v937
  %1204 = vmatpush2.bf16.msra.mxu0 %v936
  %1205 = vmatprep.subr.bf16.mxu0 %v930
  %1206 = vmatpush2.bf16.msra.mxu0 %v929
  %1207 = vmatprep.mubr.bf16.mxu0 %v351
  %1208 = vmatmul.mubr.bf16.gmra.mxu0 %v350
  %v1209 = vpop.f32.mrf.mxu0
  %v1210 = vadd.f32 %v501, %v1209
  %v1211 = vpop.f32.mrf.mxu0
  %v1212 = vadd.f32 %v505, %v1211
  %v1213 = vpop.f32.mrf.mxu0
  %v1214 = vpop.f32.mrf.mxu0
  %1215 = vdwg.mxu0
  %1216 = vmatprep.subr.bf16.mxu0 0
  %1217 = vmatpush1.bf16.msra.mxu0 %v924
  %1218 = vmatprep.subr.bf16.mxu0 0
  %1219 = vmatpush1.bf16.msra.mxu0 %v917
  %1220 = vmatprep.subr.bf16.mxu0 0
  %1221 = vmatpush1.bf16.msra.mxu0 %v910
  %1222 = vmatprep.subr.bf16.mxu0 0
  %1223 = vmatpush1.bf16.msra.mxu0 %v903
  %1224 = vmatprep.subr.bf16.mxu0 0
  %1225 = vmatpush1.bf16.msra.mxu0 %v896
  %1226 = vmatprep.subr.bf16.mxu0 0
  %1227 = vmatpush1.bf16.msra.mxu0 %v889
  %1228 = vmatprep.subr.bf16.mxu0 0
  %1229 = vmatpush1.bf16.msra.mxu0 %v882
  %1230 = vmatprep.subr.bf16.mxu0 0
  %1231 = vmatpush1.bf16.msra.mxu0 %v875
  %1232 = vmatprep.subr.bf16.mxu0 0
  %1233 = vmatpush2.bf16.msra.mxu0 %v980
  %1234 = vmatprep.subr.bf16.mxu0 0
  %1235 = vmatpush2.bf16.msra.mxu0 %v973
  %1236 = vmatprep.subr.bf16.mxu0 0
  %1237 = vmatpush2.bf16.msra.mxu0 %v966
  %1238 = vmatprep.subr.bf16.mxu0 0
  %1239 = vmatpush2.bf16.msra.mxu0 %v959
  %1240 = vmatprep.subr.bf16.mxu0 0
  %1241 = vmatpush2.bf16.msra.mxu0 %v952
  %1242 = vmatprep.subr.bf16.mxu0 0
  %1243 = vmatpush2.bf16.msra.mxu0 %v945
  %1244 = vmatprep.subr.bf16.mxu0 0
  %1245 = vmatpush2.bf16.msra.mxu0 %v938
  %1246 = vmatprep.subr.bf16.mxu0 0
  %1247 = vmatpush2.bf16.msra.mxu0 %v931
  %1248 = vmatprep.mubr.bf16.mxu0 %v351
  %1249 = vmatmul.mubr.bf16.gmra.mxu0 %v350
  %v1250 = vpop.f32.mrf.mxu0
  %v1251 = vadd.f32 %v509, %v1250
  %v1252 = vpop.f32.mrf.mxu0
  %v1253 = vpop.f32.mrf.mxu0
  %v1254 = vpop.f32.mrf.mxu0
  %1255 = vdwg.mxu0
  %v1256 = vtanh.pop %v1128
  %v1257 = vtanh.pop %v1130
  %v1258 = vtanh.pop %v1169
  %v1259 = vtanh.pop %v1171
  %v1260 = vtanh.pop %v1210
  %v1261 = vtanh.pop %v1212
  %v1262 = vtanh.pop %v1251
  %v1263 = vpack.c.bf16 %v1256, %v1256
  %v1264 = vpack.c.bf16 %v1257, %v1257
  %v1265 = vpack.c.bf16 %v1258, %v1258
  %v1266 = vpack.c.bf16 %v1259, %v1259
  %v1267 = vpack.c.bf16 %v1260, %v1260
  %v1268 = vpack.c.bf16 %v1261, %v1261
  %v1269 = vpack.c.bf16 %v1262, %v1262
  %v1277 = vunpack.c.l.b16 %v1263
  %v1278 = vunpack.c.l.b16 %v1264
  %v1279 = vunpack.c.l.b16 %v1265
  %v1280 = vunpack.c.l.b16 %v1266
  %v1281 = vunpack.c.l.b16 %v1267
  %v1282 = vunpack.c.l.b16 %v1268
  %v1283 = vunpack.c.l.b16 %v1269
  %v1284 = vpack.c.b16 %v1278, %v1277
  %v1285 = vpack.c.b16 %v1280, %v1279
  %v1286 = vpack.c.b16 %v1282, %v1281
  %v1287 = vpack.c.b16 %v1283, %v1283
  %1292 = vst [vmem:[%s8] sm:$0xff] %v1284
  %1293 = vst [vmem:[%s8 + $0x8] sm:$0xff] %v1285
  %1294 = vst [vmem:[%s8 + $0x10] sm:$0xff] %v1286
  %vm1295 = vcmask 125952
  %1296 = vst.msk [vmem:[%s8 + $0x18] sm:$0xf] %vm1295, %v1287
  // Predicated region
  $region34: #{generator_forward.1} parent=0 // pred_check
    _
  $region35: #{generator_forward.1} parent=0 // pred_check_branch
    %1298 = sbr.rel (0) target = $region37
  $region36: #{generator_forward.1} parent=0 // pred_region
    _
  $region37: #{generator_forward.1} parent=0 // pred_fallthru
    _
  // Predicated region
  $region38: #{generator_forward.1} parent=0 // pred_check
    _
  $region39: #{generator_forward.1} parent=0 // pred_check_branch
    %1300 = sbr.rel (0) target = $region41
  $region40: #{generator_forward.1} parent=0 // pred_region
    _
  $region41: #{generator_forward.1} parent=0 // pred_fallthru
    _

</llo_original>
